<compile_context>
chip_gen: v7x
topology: tpu7x:2x2x1
jax: 0.10.0
libtpu: 0.0.40
codegen_flags: <defaults>
</compile_context>

<pallas_src>
import functools
import math

import jax
import jax.numpy as jnp
import numpy as np
from jax.experimental import pallas as pl
from jax.experimental.pallas import tpu as pltpu


def mab_kernel(q_ref, k_ref, mask_ref, wq_ref, bq_ref, wkv_ref, bkv_ref,
               wo_ref, bo_ref, out_ref, *, num_heads):
    """One grid step processes block_b batch elements entirely in VMEM."""
    Bb, Nq, dim_Q = q_ref.shape
    _, Nk, dim_K = k_ref.shape
    dim_V = wq_ref.shape[1]
    H = num_heads
    scale = 1.0 / math.sqrt(dim_V)   # NOTE: torch code scales by sqrt(dim_V), not sqrt(ds)

    bf16, f32 = jnp.bfloat16, jnp.float32

    # Flatten batch x set so the projection matmuls feed the MXU with Bb*N rows.
    q2 = q_ref[...].reshape(Bb * Nq, dim_Q)      # bf16
    k2 = k_ref[...].reshape(Bb * Nk, dim_K)      # bf16

    # Projections: Q (one matmul) and fused K|V (one matmul, 2*dim_V output columns).
    Qp = jnp.dot(q2, wq_ref[...], preferred_element_type=f32) + bq_ref[...]     # (Bb*Nq, dim_V)
    KVp = jnp.dot(k2, wkv_ref[...], preferred_element_type=f32) + bkv_ref[...]  # (Bb*Nk, 2*dim_V)
    Kp3 = KVp[:, :dim_V].reshape(Bb, Nk, dim_V)   # f32
    Vp3 = KVp[:, dim_V:].reshape(Bb, Nk, dim_V)   # f32

    # Block-diagonal head mask (H*Nk, dim_V): mask[j, c] = 1 iff key-row j (head j//Nk)
    # and feature column c (head c//ds) belong to the same head.  Built host-side.
    mask = mask_ref[...]                          # f32 0/1

    # Tile K/V H times along the key axis and zero each copy outside its head's ds
    # feature columns.  One batched matmul then yields every head's scores, and the
    # same trick on V yields the attention output already concatenated over heads.
    # The score scale is folded into the tiny K-side mask constant.
    K_arr = (jnp.concatenate([Kp3] * H, axis=1) * (mask * scale)[None]).astype(bf16)  # (Bb,H*Nk,dim_V)
    V_arr = (jnp.concatenate([Vp3] * H, axis=1) * mask[None]).astype(bf16)

    Q_att = Qp.astype(bf16).reshape(Bb, Nq, dim_V)   # Qp (f32) is kept for the residual

    # S[b, q, h*Nk + k] = (Q_h . K_h) * scale  -- all heads in one batched matmul.
    S = jnp.einsum("bqd,bkd->bqk", Q_att, K_arr, preferred_element_type=f32)  # (Bb, Nq, H*Nk)
    # Row-global max is a valid stabilizer (the shared exp offset cancels in the
    # per-head normalization below); scores here are O(1) so no underflow risk.
    S = S - jnp.max(S, axis=-1, keepdims=True)
    P = jnp.exp(S)                                                            # f32

    # Weighted values for all heads, already laid out as the concatenated dim_V.
    PV = jnp.einsum("bqk,bkd->bqd", P.astype(bf16), V_arr,
                    preferred_element_type=f32).reshape(Bb * Nq, dim_V)

    # Per-head softmax denominators, broadcast directly onto that head's ds feature
    # columns via one tiny f32 matmul against the same 0/1 mask (sums stay exact).
    denom = jnp.dot(P.reshape(Bb * Nq, H * Nk), mask, preferred_element_type=f32)

    O2 = Qp + PV * pl.reciprocal(denom, approx=True)     # residual + normalized attention

    # Output projection + ReLU + residual.
    Z = jnp.dot(O2.astype(bf16), wo_ref[...], preferred_element_type=f32) + bo_ref[...]
    out = O2 + jnp.maximum(Z, 0.0)
    out_ref[...] = out.reshape(Bb, Nq, dim_V).astype(out_ref.dtype)


def _num_tensorcores():
    """Best-effort TensorCores-per-device count, used only for grid sizing."""
    try:
        kind = jax.devices()[0].device_kind.lower()
    except Exception:
        return 1
    compact = kind.replace(" ", "")
    if "v7" in compact or "tpu7" in compact:
        return 2                              # v7x: 2 TensorCores per chip
    if "v4" in compact:
        return 2                              # megacore
    if "v5p" in compact or ("v5" in compact and "lite" not in compact and "v5e" not in compact):
        return 2                              # v5p megacore ("TPU v5"); v5e is "TPU v5 lite"
    return 1                                  # v5e / v6e: single TensorCore


def _pick_block_b(B, Nq, num_tc, target_rows=512):
    """Pick the batch-block size.

    Single-TC chips (v5e/v6e): largest block (ideally the whole batch) so the grid has
    as few steps as possible -- each step costs ~0.35us of pipeline setup, comparable
    to the whole compute at these shapes.  Multi-TC chips (v7x): prefer an even number
    of equal-sized blocks so both TensorCores get work via the 'parallel' grid axis.
    target_rows caps block_b*Nq to bound f32 intermediates / vreg spill.
    """
    cap = max(1, target_rows // max(Nq, 1))
    divisors = [d for d in range(1, B + 1) if B % d == 0 and d <= cap]
    if not divisors:
        return 1
    if num_tc <= 1 or B == 1:
        # TODO(synk): with B == 1 on v7x the second TensorCore idles; a second
        # parallel grid axis over Nq would be needed to feed it.
        return max(divisors)
    even = [d for d in divisors if (B // d) % num_tc == 0]
    if even:
        return max(even)
    multi = [d for d in divisors if (B // d) >= num_tc]
    if multi:
        return max(multi)
    return max(divisors)


def mab_forward(Q, K, params, *, num_heads, dim_V, block_b=None, target_rows=512):
    B, Nq, dim_Q = Q.shape
    _, Nk, dim_K = K.shape
    assert dim_V % num_heads == 0, (dim_V, num_heads)
    ds = dim_V // num_heads
    out_dtype = Q.dtype

    if block_b is None:
        block_b = _pick_block_b(B, Nq, _num_tensorcores(), target_rows=target_rows)
    assert B % block_b == 0, (B, block_b)
    grid_b = B // block_b

    # bf16 operands for the MXU (cast once at the boundary); biases stay f32.
    Qb = Q.astype(jnp.bfloat16)
    Kb = K.astype(jnp.bfloat16)
    wq = params["wq"].astype(jnp.bfloat16)
    # Fused K|V projection: one weight with 2*dim_V output columns.
    wkv = jnp.concatenate([params["wk"], params["wv"]], axis=1).astype(jnp.bfloat16)
    bkv = jnp.concatenate([params["bk"], params["bv"]], axis=1)
    wo = params["wo"].astype(jnp.bfloat16)

    # Block-diagonal head mask used to batch all heads into single score / PV matmuls.
    head_of_key = np.repeat(np.arange(num_heads), Nk)    # (H*Nk,)
    head_of_col = np.repeat(np.arange(num_heads), ds)    # (dim_V,)
    head_mask = jnp.asarray(
        (head_of_key[:, None] == head_of_col[None, :]).astype(np.float32))

    kernel = functools.partial(mab_kernel, num_heads=num_heads)

    def const_spec(shape):
        # Constant block index: the tile is fetched once and reused across grid steps.
        return pl.BlockSpec(shape, lambda i: (0,) * len(shape))

    return pl.pallas_call(
        kernel,
        out_shape=jax.ShapeDtypeStruct((B, Nq, dim_V), out_dtype),
        grid_spec=pltpu.PrefetchScalarGridSpec(
            num_scalar_prefetch=0,
            grid=(grid_b,),
            in_specs=[
                pl.BlockSpec((block_b, Nq, dim_Q), lambda i: (i, 0, 0)),
                pl.BlockSpec((block_b, Nk, dim_K), lambda i: (i, 0, 0)),
                const_spec((num_heads * Nk, dim_V)),                          # head mask
                const_spec((dim_Q, dim_V)), const_spec((1, dim_V)),           # fc_q
                const_spec((dim_K, 2 * dim_V)), const_spec((1, 2 * dim_V)),   # fused fc_k|fc_v
                const_spec((dim_V, dim_V)), const_spec((1, dim_V)),           # fc_o
            ],
            out_specs=pl.BlockSpec((block_b, Nq, dim_V), lambda i: (i, 0, 0)),
        ),
        compiler_params=pltpu.CompilerParams(
            dimension_semantics=("parallel",),
            # Above v5e's 16 MiB scoped default, within v7x's 64 MiB physical; actual
            # per-step footprint at these tile sizes is far below this.
            vmem_limit_bytes=32 * 1024 * 1024,
        ),
    )(Qb, Kb, head_mask,
      wq, params["bq"],
      wkv, bkv,
      wo, params["bo"])


def mab_reference(Q, K, params, *, num_heads, dim_V):
    """Pure-JAX f32 transcription of the PyTorch forward (ln=False)."""
    Qp = Q @ params["wq"] + params["bq"]
    Kp = K @ params["wk"] + params["bk"]
    Vp = K @ params["wv"] + params["bv"]

    def split_heads(X):   # torch.cat(X.split(ds, 2), 0)
        return jnp.concatenate(jnp.split(X, num_heads, axis=2), axis=0)

    Q_, K_, V_ = split_heads(Qp), split_heads(Kp), split_heads(Vp)
    A = jax.nn.softmax(Q_ @ jnp.swapaxes(K_, 1, 2) / math.sqrt(dim_V), axis=2)
    O = Q_ + A @ V_
    O = jnp.concatenate(jnp.split(O, num_heads, axis=0), axis=2)
    return O + jax.nn.relu(O @ params["wo"] + params["bo"])


def mab_reference_bf16(Q, K, params, *, num_heads, dim_V):
    """Reference with the same bf16-operand / f32-accumulate casts as the kernel."""
    bf16, f32 = jnp.bfloat16, jnp.float32
    Qb, Kb = Q.astype(bf16), K.astype(bf16)
    wq, wk, wv, wo = (params[n].astype(bf16) for n in ("wq", "wk", "wv", "wo"))
    Qp = jnp.einsum("bnd,df->bnf", Qb, wq, preferred_element_type=f32) + params["bq"]
    Kp = jnp.einsum("bnd,df->bnf", Kb, wk, preferred_element_type=f32) + params["bk"]
    Vp = jnp.einsum("bnd,df->bnf", Kb, wv, preferred_element_type=f32) + params["bv"]
    ds = dim_V // num_heads
    scale = 1.0 / math.sqrt(dim_V)
    Q_att, K_att, V_att = Qp.astype(bf16), (Kp * scale).astype(bf16), Vp.astype(bf16)
    pv = []
    for h in range(num_heads):
        lo, hi = h * ds, (h + 1) * ds
        S = jnp.einsum("bqd,bkd->bqk", Q_att[..., lo:hi], K_att[..., lo:hi],
                       preferred_element_type=f32)
        P = jax.nn.softmax(S, axis=-1)
        pv.append(jnp.einsum("bqk,bkd->bqd", P.astype(bf16), V_att[..., lo:hi],
                             preferred_element_type=f32))
    O = Qp + jnp.concatenate(pv, axis=-1)
    Z = jnp.einsum("bnd,df->bnf", O.astype(bf16), wo, preferred_element_type=f32) + params["bo"]
    return O + jax.nn.relu(Z)


def init_params(key, dim_Q, dim_K, dim_V):
    """Deterministic init mimicking nn.Linear's U(-1/sqrt(fan_in), 1/sqrt(fan_in))."""
    ks = jax.random.split(key, 8)

    def lin(kw, kb, fan_in, fan_out):
        bound = 1.0 / math.sqrt(fan_in)
        w = jax.random.uniform(kw, (fan_in, fan_out), jnp.float32, -bound, bound)
        b = jax.random.uniform(kb, (1, fan_out), jnp.float32, -bound, bound)
        return w, b

    wq, bq = lin(ks[0], ks[1], dim_Q, dim_V)
    wk, bk = lin(ks[2], ks[3], dim_K, dim_V)
    wv, bv = lin(ks[4], ks[5], dim_K, dim_V)
    wo, bo = lin(ks[6], ks[7], dim_V, dim_V)
    return dict(wq=wq, bq=bq, wk=wk, bk=bk, wv=wv, bv=bv, wo=wo, bo=bo)


if __name__ == "__main__":
    configs = [
        # Small shapes consistent with the module; whole batch in one step on v5e/v6e.
        dict(B=2, Nq=8, Nk=8, dim_Q=16, dim_K=24, dim_V=32, num_heads=4),
        # Exercises the batch-blocking path (128 rows per projection matmul).
        dict(B=8, Nq=16, Nk=16, dim_Q=16, dim_K=24, dim_V=64, num_heads=4),
    ]

    key = jax.random.PRNGKey(0)
    for cfg in configs:
        key, kq, kk, kp = jax.random.split(key, 4)
        Q = jax.random.normal(kq, (cfg["B"], cfg["Nq"], cfg["dim_Q"]), jnp.float32)
        K = jax.random.normal(kk, (cfg["B"], cfg["Nk"], cfg["dim_K"]), jnp.float32)
        params = init_params(kp, cfg["dim_Q"], cfg["dim_K"], cfg["dim_V"])

        out = mab_forward(Q, K, params, num_heads=cfg["num_heads"], dim_V=cfg["dim_V"])
        out = np.asarray(jax.block_until_ready(out))

        # Tight check against a reference that uses the same bf16-operand casts.
        ref_match = np.asarray(mab_reference_bf16(
            Q, K, params, num_heads=cfg["num_heads"], dim_V=cfg["dim_V"]))
        np.testing.assert_allclose(out, ref_match, rtol=2e-2, atol=2e-2)

        # Looser check against the full-f32 transcription of the PyTorch module
        # (slack accounts for bf16 MXU operands).
        ref_f32 = np.asarray(mab_reference(
            Q, K, params, num_heads=cfg["num_heads"], dim_V=cfg["dim_V"]))
        np.testing.assert_allclose(out, ref_f32, rtol=1e-1, atol=1e-1)

    print("KERNEL_OK")
</pallas_src>

<mosaic_0001>
module attributes {stable_mosaic.version = 11 : i64} {
  func.func @mab_kernel(%arg0: i32, %arg1: memref<2x8x16xbf16, #tpu.memory_space<vmem>>, %arg2: memref<2x8x24xbf16, #tpu.memory_space<vmem>>, %arg3: memref<32x32xf32, #tpu.memory_space<vmem>>, %arg4: memref<16x32xbf16, #tpu.memory_space<vmem>>, %arg5: memref<1x32xf32, #tpu.memory_space<vmem>>, %arg6: memref<24x64xbf16, #tpu.memory_space<vmem>>, %arg7: memref<1x64xf32, #tpu.memory_space<vmem>>, %arg8: memref<32x32xbf16, #tpu.memory_space<vmem>>, %arg9: memref<1x32xf32, #tpu.memory_space<vmem>>, %arg10: memref<2x8x32xf32, #tpu.memory_space<vmem>>) attributes {dimension_semantics = [#tpu.dimension_semantics<parallel>], iteration_bounds = array<i64: 1>, scalar_prefetch = 0 : i64, scratch_operands = 0 : i64, tpu.core_type = #tpu.core_type<tc>, window_params = [{transform_indices = @transform_0, window_bounds = array<i64: 2, 8, 16>}, {transform_indices = @transform_1, window_bounds = array<i64: 2, 8, 24>}, {pipeline_mode = #tpu.pipeline_mode<synchronous>, transform_indices = @transform_2, window_bounds = array<i64: 32, 32>}, {pipeline_mode = #tpu.pipeline_mode<synchronous>, transform_indices = @transform_3, window_bounds = array<i64: 16, 32>}, {pipeline_mode = #tpu.pipeline_mode<synchronous>, transform_indices = @transform_4, window_bounds = array<i64: 1, 32>}, {pipeline_mode = #tpu.pipeline_mode<synchronous>, transform_indices = @transform_5, window_bounds = array<i64: 24, 64>}, {pipeline_mode = #tpu.pipeline_mode<synchronous>, transform_indices = @transform_6, window_bounds = array<i64: 1, 64>}, {pipeline_mode = #tpu.pipeline_mode<synchronous>, transform_indices = @transform_7, window_bounds = array<i64: 32, 32>}, {pipeline_mode = #tpu.pipeline_mode<synchronous>, transform_indices = @transform_8, window_bounds = array<i64: 1, 32>}, {transform_indices = @transform_9, window_bounds = array<i64: 2, 8, 32>}]} {
    %c0 = arith.constant 0 : index
    %c0_0 = arith.constant 0 : index
    %c0_1 = arith.constant 0 : index
    %0 = vector.load %arg1[%c0, %c0_0, %c0_1] : memref<2x8x16xbf16, #tpu.memory_space<vmem>>, vector<2x8x16xbf16>
    %1 = vector.shape_cast %0 : vector<2x8x16xbf16> to vector<16x16xbf16>
    %c0_2 = arith.constant 0 : index
    %c0_3 = arith.constant 0 : index
    %c0_4 = arith.constant 0 : index
    %2 = vector.load %arg2[%c0_2, %c0_3, %c0_4] : memref<2x8x24xbf16, #tpu.memory_space<vmem>>, vector<2x8x24xbf16>
    %3 = vector.shape_cast %2 : vector<2x8x24xbf16> to vector<16x24xbf16>
    %c0_5 = arith.constant 0 : index
    %c0_6 = arith.constant 0 : index
    %4 = vector.load %arg4[%c0_5, %c0_6] : memref<16x32xbf16, #tpu.memory_space<vmem>>, vector<16x32xbf16>
    %cst = arith.constant dense<0.000000e+00> : vector<16x32xf32>
    %5 = tpu.matmul %1, %4, %cst {dimension_numbers = #tpu.dot_dimension_numbers<[1], [0], [0], [1], [0, 0, 1, 1], [], []>} : vector<16x16xbf16>, vector<16x32xbf16>, vector<16x32xf32> -> vector<16x32xf32>
    %c0_7 = arith.constant 0 : index
    %c0_8 = arith.constant 0 : index
    %6 = vector.load %arg5[%c0_7, %c0_8] : memref<1x32xf32, #tpu.memory_space<vmem>>, vector<1x32xf32>
    %7 = vector.broadcast %6 : vector<1x32xf32> to vector<16x32xf32>
    %8 = arith.addf %5, %7 : vector<16x32xf32>
    %c0_9 = arith.constant 0 : index
    %c0_10 = arith.constant 0 : index
    %9 = vector.load %arg6[%c0_9, %c0_10] : memref<24x64xbf16, #tpu.memory_space<vmem>>, vector<24x64xbf16>
    %cst_11 = arith.constant dense<0.000000e+00> : vector<16x64xf32>
    %10 = tpu.matmul %3, %9, %cst_11 {dimension_numbers = #tpu.dot_dimension_numbers<[1], [0], [0], [1], [0, 0, 1, 1], [], []>} : vector<16x24xbf16>, vector<24x64xbf16>, vector<16x64xf32> -> vector<16x64xf32>
    %c0_12 = arith.constant 0 : index
    %c0_13 = arith.constant 0 : index
    %11 = vector.load %arg7[%c0_12, %c0_13] : memref<1x64xf32, #tpu.memory_space<vmem>>, vector<1x64xf32>
    %12 = vector.broadcast %11 : vector<1x64xf32> to vector<16x64xf32>
    %13 = arith.addf %10, %12 : vector<16x64xf32>
    %14 = vector.extract_strided_slice %13 {offsets = [0, 0], sizes = [16, 32], strides = [1, 1]} : vector<16x64xf32> to vector<16x32xf32>
    %15 = vector.shape_cast %14 : vector<16x32xf32> to vector<2x8x32xf32>
    %16 = vector.extract_strided_slice %13 {offsets = [0, 32], sizes = [16, 32], strides = [1, 1]} : vector<16x64xf32> to vector<16x32xf32>
    %17 = vector.shape_cast %16 : vector<16x32xf32> to vector<2x8x32xf32>
    %c0_14 = arith.constant 0 : index
    %c0_15 = arith.constant 0 : index
    %18 = vector.load %arg3[%c0_14, %c0_15] : memref<32x32xf32, #tpu.memory_space<vmem>>, vector<32x32xf32>
    %19 = tpu.concatenate %15, %15, %15, %15 in 1 : vector<2x8x32xf32>, vector<2x8x32xf32>, vector<2x8x32xf32>, vector<2x8x32xf32> -> vector<2x32x32xf32>
    %cst_16 = arith.constant 0.176776692 : f32
    %20 = vector.broadcast %cst_16 : f32 to vector<32x32xf32>
    %21 = arith.mulf %18, %20 : vector<32x32xf32>
    %22 = vector.shape_cast %21 : vector<32x32xf32> to vector<1x32x32xf32>
    %23 = vector.broadcast %22 : vector<1x32x32xf32> to vector<2x32x32xf32>
    %24 = arith.mulf %19, %23 : vector<2x32x32xf32>
    %25 = arith.truncf %24 : vector<2x32x32xf32> to vector<2x32x32xbf16>
    %26 = tpu.concatenate %17, %17, %17, %17 in 1 : vector<2x8x32xf32>, vector<2x8x32xf32>, vector<2x8x32xf32>, vector<2x8x32xf32> -> vector<2x32x32xf32>
    %27 = vector.shape_cast %18 : vector<32x32xf32> to vector<1x32x32xf32>
    %28 = vector.broadcast %27 : vector<1x32x32xf32> to vector<2x32x32xf32>
    %29 = arith.mulf %26, %28 : vector<2x32x32xf32>
    %30 = arith.truncf %29 : vector<2x32x32xf32> to vector<2x32x32xbf16>
    %31 = arith.truncf %8 : vector<16x32xf32> to vector<16x32xbf16>
    %32 = vector.shape_cast %31 : vector<16x32xbf16> to vector<2x8x32xbf16>
    "tpu.trace_start"() <{level = 10 : i32, message = "bqd,bkd->bqk"}> : () -> ()
    %cst_17 = arith.constant dense<0.000000e+00> : vector<2x8x32xf32>
    %33 = tpu.matmul %32, %25, %cst_17 {dimension_numbers = #tpu.dot_dimension_numbers<[2], [2], [1], [1], [0, 0, 0, 1, 1, 1], [0], [0]>} : vector<2x8x32xbf16>, vector<2x32x32xbf16>, vector<2x8x32xf32> -> vector<2x8x32xf32>
    "tpu.trace_stop"() : () -> ()
    %cst_18 = arith.constant dense<0xFF800000> : vector<2x8xf32>
    %34 = vector.multi_reduction <maximumf>, %33, %cst_18 [2] : vector<2x8x32xf32> to vector<2x8xf32>
    %35 = vector.shape_cast %34 : vector<2x8xf32> to vector<2x8x1xf32>
    %36 = vector.broadcast %35 : vector<2x8x1xf32> to vector<2x8x32xf32>
    %37 = arith.subf %33, %36 : vector<2x8x32xf32>
    %38 = math.exp %37 : vector<2x8x32xf32>
    %39 = arith.truncf %38 : vector<2x8x32xf32> to vector<2x8x32xbf16>
    "tpu.trace_start"() <{level = 10 : i32, message = "bqk,bkd->bqd"}> : () -> ()
    %cst_19 = arith.constant dense<0.000000e+00> : vector<2x8x32xf32>
    %40 = tpu.matmul %39, %30, %cst_19 {dimension_numbers = #tpu.dot_dimension_numbers<[2], [1], [1], [2], [0, 0, 0, 1, 1, 2], [0], [0]>} : vector<2x8x32xbf16>, vector<2x32x32xbf16>, vector<2x8x32xf32> -> vector<2x8x32xf32>
    "tpu.trace_stop"() : () -> ()
    %41 = vector.shape_cast %40 : vector<2x8x32xf32> to vector<16x32xf32>
    %42 = vector.shape_cast %38 : vector<2x8x32xf32> to vector<16x32xf32>
    %cst_20 = arith.constant dense<0.000000e+00> : vector<16x32xf32>
    %43 = tpu.matmul %42, %18, %cst_20 {dimension_numbers = #tpu.dot_dimension_numbers<[1], [0], [0], [1], [0, 0, 1, 1], [], []>} : vector<16x32xf32>, vector<32x32xf32>, vector<16x32xf32> -> vector<16x32xf32>
    %44 = tpu.reciprocal %43 {approx = true} : vector<16x32xf32> -> vector<16x32xf32>
    %45 = arith.mulf %41, %44 : vector<16x32xf32>
    %46 = arith.addf %8, %45 : vector<16x32xf32>
    %47 = arith.truncf %46 : vector<16x32xf32> to vector<16x32xbf16>
    %c0_21 = arith.constant 0 : index
    %c0_22 = arith.constant 0 : index
    %48 = vector.load %arg8[%c0_21, %c0_22] : memref<32x32xbf16, #tpu.memory_space<vmem>>, vector<32x32xbf16>
    %cst_23 = arith.constant dense<0.000000e+00> : vector<16x32xf32>
    %49 = tpu.matmul %47, %48, %cst_23 {dimension_numbers = #tpu.dot_dimension_numbers<[1], [0], [0], [1], [0, 0, 1, 1], [], []>} : vector<16x32xbf16>, vector<32x32xbf16>, vector<16x32xf32> -> vector<16x32xf32>
    %c0_24 = arith.constant 0 : index
    %c0_25 = arith.constant 0 : index
    %50 = vector.load %arg9[%c0_24, %c0_25] : memref<1x32xf32, #tpu.memory_space<vmem>>, vector<1x32xf32>
    %51 = vector.broadcast %50 : vector<1x32xf32> to vector<16x32xf32>
    %52 = arith.addf %49, %51 : vector<16x32xf32>
    %cst_26 = arith.constant 0.000000e+00 : f32
    %53 = vector.broadcast %cst_26 : f32 to vector<16x32xf32>
    %54 = arith.maximumf %52, %53 : vector<16x32xf32>
    %55 = arith.addf %46, %54 : vector<16x32xf32>
    %56 = vector.shape_cast %55 : vector<16x32xf32> to vector<2x8x32xf32>
    %c0_27 = arith.constant 0 : index
    %c0_28 = arith.constant 0 : index
    %c0_29 = arith.constant 0 : index
    %57 = vector.load %arg10[%c0_27, %c0_28, %c0_29] : memref<2x8x32xf32, #tpu.memory_space<vmem>>, vector<2x8x32xf32>
    tpu.vector_store %arg10[%c0_27, %c0_28, %c0_29], %56 {strides = array<i32>} : memref<2x8x32xf32, #tpu.memory_space<vmem>>, vector<2x8x32xf32>,
    return
  }
  func.func @transform_0(%arg0: i32) -> (i32, i32, i32) {
    %c0_i32 = arith.constant 0 : i32
    %c0_i32_0 = arith.constant 0 : i32
    %c0_i32_1 = arith.constant 0 : i32
    return %arg0, %c0_i32, %c0_i32_0 : i32, i32, i32
  }
  func.func @transform_1(%arg0: i32) -> (i32, i32, i32) {
    %c0_i32 = arith.constant 0 : i32
    %c0_i32_0 = arith.constant 0 : i32
    %c0_i32_1 = arith.constant 0 : i32
    return %arg0, %c0_i32, %c0_i32_0 : i32, i32, i32
  }
  func.func @transform_2(%arg0: i32) -> (i32, i32) {
    %c0_i32 = arith.constant 0 : i32
    %c0_i32_0 = arith.constant 0 : i32
    %c0_i32_1 = arith.constant 0 : i32
    return %c0_i32, %c0_i32_0 : i32, i32
  }
  func.func @transform_3(%arg0: i32) -> (i32, i32) {
    %c0_i32 = arith.constant 0 : i32
    %c0_i32_0 = arith.constant 0 : i32
    %c0_i32_1 = arith.constant 0 : i32
    return %c0_i32, %c0_i32_0 : i32, i32
  }
  func.func @transform_4(%arg0: i32) -> (i32, i32) {
    %c0_i32 = arith.constant 0 : i32
    %c0_i32_0 = arith.constant 0 : i32
    %c0_i32_1 = arith.constant 0 : i32
    return %c0_i32, %c0_i32_0 : i32, i32
  }
  func.func @transform_5(%arg0: i32) -> (i32, i32) {
    %c0_i32 = arith.constant 0 : i32
    %c0_i32_0 = arith.constant 0 : i32
    %c0_i32_1 = arith.constant 0 : i32
    return %c0_i32, %c0_i32_0 : i32, i32
  }
  func.func @transform_6(%arg0: i32) -> (i32, i32) {
    %c0_i32 = arith.constant 0 : i32
    %c0_i32_0 = arith.constant 0 : i32
    %c0_i32_1 = arith.constant 0 : i32
    return %c0_i32, %c0_i32_0 : i32, i32
  }
  func.func @transform_7(%arg0: i32) -> (i32, i32) {
    %c0_i32 = arith.constant 0 : i32
    %c0_i32_0 = arith.constant 0 : i32
    %c0_i32_1 = arith.constant 0 : i32
    return %c0_i32, %c0_i32_0 : i32, i32
  }
  func.func @transform_8(%arg0: i32) -> (i32, i32) {
    %c0_i32 = arith.constant 0 : i32
    %c0_i32_0 = arith.constant 0 : i32
    %c0_i32_1 = arith.constant 0 : i32
    return %c0_i32, %c0_i32_0 : i32, i32
  }
  func.func @transform_9(%arg0: i32) -> (i32, i32, i32) {
    %c0_i32 = arith.constant 0 : i32
    %c0_i32_0 = arith.constant 0 : i32
    %c0_i32_1 = arith.constant 0 : i32
    return %arg0, %c0_i32, %c0_i32_0 : i32, i32, i32
  }
}

</mosaic_0001>

<llo_original>
// kernel: tpu_custom_call.1
$region0: #{tpu_custom_call.1}
  #allocation0 [shape = 'u32[]', space=smem, size = 0x4, offset = 0x4, fixed_abs, tag = 'smem constant byte address 0x4 - core index']
  #allocation1 [shape = 'u32[144,128]{1,0:T(1,128)}', space=vmem, size = 0x12000, scoped, tag = 'internal scratch']
  %s0 = inlined_call_operand.hbm [shape: bf16[2,8,16], index: 0, kind: input, shape index: {}]
  %s1 = inlined_call_operand.hbm [shape: bf16[2,8,24], index: 1, kind: input, shape index: {}]
  %s2 = inlined_call_operand.hbm [shape: f32[32,32], index: 2, kind: input, shape index: {}]
  %s3 = inlined_call_operand.vmem [shape: bf16[16,32], index: 3, kind: input, shape index: {}]
  %s4 = inlined_call_operand.vmem [shape: f32[1,32], index: 4, kind: input, shape index: {}]
  %s5 = inlined_call_operand.hbm [shape: bf16[24,64], index: 5, kind: input, shape index: {}]
  %s6 = inlined_call_operand.vmem [shape: f32[1,64], index: 6, kind: input, shape index: {}]
  %s7 = inlined_call_operand.vmem [shape: bf16[32,32], index: 7, kind: input, shape index: {}]
  %s8 = inlined_call_operand.vmem [shape: f32[1,32], index: 8, kind: input, shape index: {}]
  %s9 = inlined_call_operand.hbm [shape: f32[2,8,32], index: 9, kind: output, shape index: {}]
  %s10 = sld [smem:[#allocation0]]
  $region62: #{tpu_custom_call.1} parent=0
    _
  %s12 = ssub.s32 1, %s10
  %s13 = scalar_select 0, %s12, %s10
  $region1: #{tpu_custom_call.1} parent=0
    #allocation2 [shape = 'u8[4096]{0}', space=vmem, size = 0x1000, scoped, tag = 'input window, operand 0, single buffered']
    #allocation3 [shape = 's32[1]{0}', space=sflag, size = 0x4, scoped, tag = 'scoped memory for tpu_custom_call.1']
    #allocation4 [shape = 's32[1]{0}', space=sflag, size = 0x4, scoped, tag = 'scoped memory for tpu_custom_call.1']
    #allocation5 [shape = 'u8[4096]{0}', space=vmem, size = 0x1000, scoped, tag = 'input window, operand 1, single buffered']
    #allocation6 [shape = 's32[1]{0}', space=sflag, size = 0x4, scoped, tag = 'scoped memory for tpu_custom_call.1']
    #allocation7 [shape = 'u8[16384]{0}', space=vmem, size = 0x4000, scoped, tag = 'input window, operand 2, single buffered']
    #allocation8 [shape = 'u8[6144]{0}', space=vmem, size = 0x1800, scoped, tag = 'input window, operand 5, single buffered']
    #allocation9 [shape = 's32[1]{0}', space=sflag, size = 0x4, scoped, tag = 'scoped memory for tpu_custom_call.1']
    #allocation10 [shape = 'u8[8192]{0}', space=vmem, size = 0x2000, scoped, tag = 'output window, operand 0, single buffered']
    %14 = vsyncpa [#allocation3], 0
    %15 = vsyncpa [#allocation6], 0
    %16 = vsyncpa [#allocation9], 0
    %17 = vsyncpa [#allocation4], 0
    // Predicated region
    $region2: #{tpu_custom_call.1} parent=1 // pred_check
      _
    $region3: #{tpu_custom_call.1} parent=1 // pred_check_branch
      %19 = sbr.rel (0) target = $region5
    $region4: #{tpu_custom_call.1} parent=1 // pred_region
      %s21 = ssub.s32 128, 128
      %22 = vsyncadd [#allocation3], %s21
      %s23 = sshll.u32 [#allocation2], 4
      %s24 = int_to_ptr.vmem [resolvable:$true] %s23
      %29 = dma.hbm_to_vmem [thread:$0]  %s0, 128, %s24, [#allocation3], 64, 64, 4
    $region5: #{tpu_custom_call.1} parent=1 // pred_fallthru
      _
    // Predicated region
    $region6: #{tpu_custom_call.1} parent=1 // pred_check
      _
    $region7: #{tpu_custom_call.1} parent=1 // pred_check_branch
      %31 = sbr.rel (0) target = $region9
    $region8: #{tpu_custom_call.1} parent=1 // pred_region
      %s33 = ssub.s32 128, 128
      %34 = vsyncadd [#allocation6], %s33
      %s35 = sshll.u32 [#allocation5], 4
      %s36 = int_to_ptr.vmem [resolvable:$true] %s35
      %41 = dma.hbm_to_vmem [thread:$0]  %s1, 128, %s36, [#allocation6], 64, 64, 4
    $region9: #{tpu_custom_call.1} parent=1 // pred_fallthru
      _
    // Predicated region
    $region10: #{tpu_custom_call.1} parent=1 // pred_check
      _
    $region11: #{tpu_custom_call.1} parent=1 // pred_check_branch
      %43 = sbr.rel (0) target = $region13
    $region12: #{tpu_custom_call.1} parent=1 // pred_region
      %s45 = ssub.s32 512, 512
      %46 = vsyncadd [#allocation6], %s45
      %s47 = sshll.u32 [#allocation7], 4
      %s48 = int_to_ptr.vmem [resolvable:$true] %s47
      %53 = dma.hbm_to_vmem [thread:$0]  %s2, 512, %s48, [#allocation6], 128, 128, 8
    $region13: #{tpu_custom_call.1} parent=1 // pred_fallthru
      _
    // Predicated region
    $region14: #{tpu_custom_call.1} parent=1 // pred_check
      _
    $region15: #{tpu_custom_call.1} parent=1 // pred_check_branch
      %55 = sbr.rel (0) target = $region17
    $region16: #{tpu_custom_call.1} parent=1 // pred_region
      _
    $region17: #{tpu_custom_call.1} parent=1 // pred_fallthru
      _
    // Predicated region
    $region18: #{tpu_custom_call.1} parent=1 // pred_check
      _
    $region19: #{tpu_custom_call.1} parent=1 // pred_check_branch
      %57 = sbr.rel (0) target = $region21
    $region20: #{tpu_custom_call.1} parent=1 // pred_region
      _
    $region21: #{tpu_custom_call.1} parent=1 // pred_fallthru
      _
    // Predicated region
    $region22: #{tpu_custom_call.1} parent=1 // pred_check
      _
    $region23: #{tpu_custom_call.1} parent=1 // pred_check_branch
      %59 = sbr.rel (0) target = $region25
    $region24: #{tpu_custom_call.1} parent=1 // pred_region
      %s61 = ssub.s32 192, 192
      %62 = vsyncadd [#allocation9], %s61
      %s63 = sshll.u32 [#allocation8], 4
      %s64 = int_to_ptr.vmem [resolvable:$true] %s63
      %69 = dma.hbm_to_vmem [thread:$0]  %s5, 192, %s64, [#allocation9], 64, 64, 4
    $region25: #{tpu_custom_call.1} parent=1 // pred_fallthru
      _
    // Predicated region
    $region26: #{tpu_custom_call.1} parent=1 // pred_check
      _
    $region27: #{tpu_custom_call.1} parent=1 // pred_check_branch
      %71 = sbr.rel (0) target = $region29
    $region28: #{tpu_custom_call.1} parent=1 // pred_region
      _
    $region29: #{tpu_custom_call.1} parent=1 // pred_fallthru
      _
    // Predicated region
    $region30: #{tpu_custom_call.1} parent=1 // pred_check
      _
    $region31: #{tpu_custom_call.1} parent=1 // pred_check_branch
      %73 = sbr.rel (0) target = $region33
    $region32: #{tpu_custom_call.1} parent=1 // pred_region
      _
    $region33: #{tpu_custom_call.1} parent=1 // pred_fallthru
      _
    // Predicated region
    $region34: #{tpu_custom_call.1} parent=1 // pred_check
      _
    $region35: #{tpu_custom_call.1} parent=1 // pred_check_branch
      %75 = sbr.rel (0) target = $region37
    $region36: #{tpu_custom_call.1} parent=1 // pred_region
      _
    $region37: #{tpu_custom_call.1} parent=1 // pred_fallthru
      _
    // Predicated region
    $region38: #{tpu_custom_call.1} parent=1 // pred_check
      _
    $region39: #{tpu_custom_call.1} parent=1 // pred_check_branch
      %77 = sbr.rel (0) target = $region41
    $region40: #{tpu_custom_call.1} parent=1 // pred_region
      %78 = dma.done [#allocation3], 128
    $region41: #{tpu_custom_call.1} parent=1 // pred_fallthru
      _
    // Predicated region
    $region42: #{tpu_custom_call.1} parent=1 // pred_check
      _
    $region43: #{tpu_custom_call.1} parent=1 // pred_check_branch
      %80 = sbr.rel (0) target = $region45
    $region44: #{tpu_custom_call.1} parent=1 // pred_region
      %81 = dma.done [#allocation6], 128
    $region45: #{tpu_custom_call.1} parent=1 // pred_fallthru
      _
    // Predicated region
    $region46: #{tpu_custom_call.1} parent=1 // pred_check
      _
    $region47: #{tpu_custom_call.1} parent=1 // pred_check_branch
      %83 = sbr.rel (0) target = $region49
    $region48: #{tpu_custom_call.1} parent=1 // pred_region
      %84 = dma.done [#allocation6], 512
    $region49: #{tpu_custom_call.1} parent=1 // pred_fallthru
      _
    // Predicated region
    $region50: #{tpu_custom_call.1} parent=1 // pred_check
      _
    $region51: #{tpu_custom_call.1} parent=1 // pred_check_branch
      %86 = sbr.rel (0) target = $region53
    $region52: #{tpu_custom_call.1} parent=1 // pred_region
      %87 = dma.done [#allocation9], 192
    $region53: #{tpu_custom_call.1} parent=1 // pred_fallthru
      _
    %v89 = vld [vmem:[#allocation2] sm:$0xf]
    %v90 = vld [vmem:[#allocation2 + $0x4] sm:$0xf]
    %v91 = vld [vmem:[#allocation5] sm:$0xf]
    %v92 = vld [vmem:[#allocation5 + $0x4] sm:$0xf]
    %v93 = vld [vmem:[%s3] sm:$0xf]
    %v94 = vld [vmem:[%s3 + $0x4] sm:$0xf]
    %v95 = vld [vmem:[%s4] sm:$0x1]
    %v97 = vlaneseq
    %v98 = vshrl.u32 %v97, 7
    %v99 = vsub.s32 0, %v98
    %v100 = vrot.slane %v95, %v99
    %v104 = vunpack.c.l.b16 %v89
    %v105 = vunpack.c.l.b16 %v90
    %v106 = vpack.c.b16 %v105, %v104
    %v109 = vunpack.c.l.b16 %v93
    %v110 = vunpack.c.l.b16 %v94
    %v111 = vpack.c.b16 %v110, %v109
    %vm113 = vcmask 130048
    %v115 = vsel %vm113, %v106, 0
    %117 = vmatprep.subr.bf16.mxu0 0
    %118 = vmatpush1.bf16.msra.mxu0 %v111
    %119 = vmatprep.subr.bf16.mxu0 0
    %120 = vmatpush1.bf16.msra.mxu0 0
    %121 = vmatprep.subr.bf16.mxu0 0
    %122 = vmatpush1.bf16.msra.mxu0 0
    %123 = vmatprep.subr.bf16.mxu0 0
    %124 = vmatpush1.bf16.msra.mxu0 0
    %125 = vmatprep.subr.bf16.mxu0 0
    %126 = vmatpush1.bf16.msra.mxu0 0
    %127 = vmatprep.subr.bf16.mxu0 0
    %128 = vmatpush1.bf16.msra.mxu0 0
    %129 = vmatprep.subr.bf16.mxu0 0
    %130 = vmatpush1.bf16.msra.mxu0 0
    %131 = vmatprep.subr.bf16.mxu0 0
    %132 = vmatpush1.bf16.msra.mxu0 0
    %133 = vmatprep.subr.bf16.mxu0 0
    %134 = vmatpush1.bf16.msra.mxu0 0
    %135 = vmatprep.subr.bf16.mxu0 0
    %136 = vmatpush1.bf16.msra.mxu0 0
    %137 = vmatprep.subr.bf16.mxu0 0
    %138 = vmatpush1.bf16.msra.mxu0 0
    %139 = vmatprep.subr.bf16.mxu0 0
    %140 = vmatpush1.bf16.msra.mxu0 0
    %141 = vmatprep.subr.bf16.mxu0 0
    %142 = vmatpush1.bf16.msra.mxu0 0
    %143 = vmatprep.subr.bf16.mxu0 0
    %144 = vmatpush1.bf16.msra.mxu0 0
    %145 = vmatprep.subr.bf16.mxu0 0
    %146 = vmatpush1.bf16.msra.mxu0 0
    %147 = vmatprep.subr.bf16.mxu0 0
    %148 = vmatpush1.bf16.msra.mxu0 0
    %149 = vmatprep.mubr.bf16.mxu0 0
    %150 = vmatmul.mubr.bf16.gmra.mrb[0].mxu0 %v115
    %v151 = vpop.f32.mrb[0].mxu0
    %v152 = vadd.f32 %v100, %v151
    %v153 = vpop.f32.mrb[0].mxu0
    %v154 = vpop.f32.mrb[0].mxu0
    %v155 = vadd.f32 %v100, %v154
    %v156 = vpop.f32.mrb[0].mxu0
    %157 = vdwg.mxu0
    %v158 = vld [vmem:[#allocation8] sm:$0xf]
    %v159 = vld [vmem:[#allocation8 + $0x4] sm:$0xf]
    %v160 = vld [vmem:[#allocation8 + $0x8] sm:$0xf]
    %v161 = vld [vmem:[%s6] sm:$0x1]
    %v163 = vlaneseq
    %v164 = vshrl.u32 %v163, 7
    %v165 = vsub.s32 0, %v164
    %v166 = vrot.slane %v161, %v165
    %v170 = vunpack.c.l.b16 %v91
    %v171 = vunpack.c.l.b16 %v92
    %v172 = vpack.c.b16 %v171, %v170
    %v176 = vunpack.c.l.b16 %v158
    %v177 = vunpack.c.l.b16 %v159
    %v178 = vunpack.c.l.b16 %v160
    %v179 = vpack.c.b16 %v177, %v176
    %v180 = vpack.c.b16 %v178, %v178
    %vm182 = vcmask 195584
    %v184 = vsel %vm182, %v172, 0
    %vm186 = vcmask 1043456
    %v188 = vsel %vm186, %v180, 0
    %190 = vmatprep.subr.bf16.mxu0 0
    %191 = vmatpush1.bf16.msra.mxu0 %v179
    %192 = vmatprep.subr.bf16.mxu0 0
    %193 = vmatpush1.bf16.msra.mxu0 %v188
    %194 = vmatprep.subr.bf16.mxu0 0
    %195 = vmatpush1.bf16.msra.mxu0 0
    %196 = vmatprep.subr.bf16.mxu0 0
    %197 = vmatpush1.bf16.msra.mxu0 0
    %198 = vmatprep.subr.bf16.mxu0 0
    %199 = vmatpush1.bf16.msra.mxu0 0
    %200 = vmatprep.subr.bf16.mxu0 0
    %201 = vmatpush1.bf16.msra.mxu0 0
    %202 = vmatprep.subr.bf16.mxu0 0
    %203 = vmatpush1.bf16.msra.mxu0 0
    %204 = vmatprep.subr.bf16.mxu0 0
    %205 = vmatpush1.bf16.msra.mxu0 0
    %206 = vmatprep.subr.bf16.mxu0 0
    %207 = vmatpush1.bf16.msra.mxu0 0
    %208 = vmatprep.subr.bf16.mxu0 0
    %209 = vmatpush1.bf16.msra.mxu0 0
    %210 = vmatprep.subr.bf16.mxu0 0
    %211 = vmatpush1.bf16.msra.mxu0 0
    %212 = vmatprep.subr.bf16.mxu0 0
    %213 = vmatpush1.bf16.msra.mxu0 0
    %214 = vmatprep.subr.bf16.mxu0 0
    %215 = vmatpush1.bf16.msra.mxu0 0
    %216 = vmatprep.subr.bf16.mxu0 0
    %217 = vmatpush1.bf16.msra.mxu0 0
    %218 = vmatprep.subr.bf16.mxu0 0
    %219 = vmatpush1.bf16.msra.mxu0 0
    %220 = vmatprep.subr.bf16.mxu0 0
    %221 = vmatpush1.bf16.msra.mxu0 0
    %222 = vmatprep.mubr.bf16.mxu0 0
    %223 = vmatmul.mubr.bf16.gmra.mrb[0].mxu0 %v184
    %v224 = vpop.f32.mrb[0].mxu0
    %v225 = vadd.f32 %v166, %v224
    %v226 = vpop.f32.mrb[0].mxu0
    %v227 = vpop.f32.mrb[0].mxu0
    %v228 = vadd.f32 %v166, %v227
    %v229 = vpop.f32.mrb[0].mxu0
    %230 = vdwg.mxu0
    %v231 = vld [vmem:[#allocation7] sm:$0xff]
    %v232 = vld [vmem:[#allocation7 + $0x8] sm:$0xff]
    %v233 = vld [vmem:[#allocation7 + $0x10] sm:$0xff]
    %v234 = vld [vmem:[#allocation7 + $0x18] sm:$0xff]
    %v235 = vmul.f32 %v231, 0.17677669
    %v236 = vmul.f32 %v232, 0.17677669
    %v237 = vmul.f32 %v233, 0.17677669
    %v238 = vmul.f32 %v234, 0.17677669
    %v239 = vmul.f32 %v225, %v235
    %v240 = vmul.f32 %v225, %v236
    %v241 = vmul.f32 %v225, %v237
    %v242 = vmul.f32 %v225, %v238
    %v243 = vmul.f32 %v228, %v235
    %v244 = vmul.f32 %v228, %v236
    %v245 = vmul.f32 %v228, %v237
    %v246 = vmul.f32 %v228, %v238
    %v247 = vpack.c.bf16 %v240, %v239
    %v248 = vpack.c.bf16 %v242, %v241
    %v249 = vpack.c.bf16 %v244, %v243
    %v250 = vpack.c.bf16 %v246, %v245
    %255 = vrot.lane.b32.xlu0 %v231, 32
    %v256 = vpop.permute.xlu0 %255
    %257 = vrot.lane.b32.xlu0 %v232, 32
    %v258 = vpop.permute.xlu0 %257
    %259 = vrot.lane.b32.xlu0 %v233, 32
    %v260 = vpop.permute.xlu0 %259
    %261 = vrot.lane.b32.xlu0 %v234, 32
    %v262 = vpop.permute.xlu0 %261
    %v267 = vmul.f32 %v225, %v256
    %v268 = vmul.f32 %v225, %v258
    %v269 = vmul.f32 %v225, %v260
    %v270 = vmul.f32 %v225, %v262
    %v271 = vmul.f32 %v228, %v256
    %v272 = vmul.f32 %v228, %v258
    %v273 = vmul.f32 %v228, %v260
    %v274 = vmul.f32 %v228, %v262
    %v275 = vpack.c.bf16 %v268, %v267
    %v276 = vpack.c.bf16 %v270, %v269
    %v277 = vpack.c.bf16 %v272, %v271
    %v278 = vpack.c.bf16 %v274, %v273
    %v279 = vpack.c.bf16 %v155, %v152
    %v281 = vunpack.c.l.b16 %v279
    %v282 = vunpack.c.h.b16 %v279
    %v283 = vpack.c.b16 %v281, %v281
    %v284 = vpack.c.b16 %v282, %v282
    %vm285 = vcmask 261120
    %v287 = vsel %vm285, %v283, 0
    %v290 = vsel %vm285, %v247, 0
    %v293 = vsel %vm285, %v248, 0
    %295 = vmatprep.subr.bf16.mxu0 0
    %296 = vmatpush1.bf16.xpose.msra.mxu0 %v290
    %297 = vmatprep.subr.bf16.mxu0 0
    %298 = vmatpush1.bf16.xpose.msra.mxu0 %v293
    %299 = vmatprep.subr.bf16.mxu0 0
    %300 = vmatpush1.bf16.xpose.msra.mxu0 0
    %301 = vmatprep.subr.bf16.mxu0 0
    %302 = vmatpush1.bf16.xpose.msra.mxu0 0
    %303 = vmatprep.subr.bf16.mxu0 0
    %304 = vmatpush1.bf16.xpose.msra.mxu0 0
    %305 = vmatprep.subr.bf16.mxu0 0
    %306 = vmatpush1.bf16.xpose.msra.mxu0 0
    %307 = vmatprep.subr.bf16.mxu0 0
    %308 = vmatpush1.bf16.xpose.msra.mxu0 0
    %309 = vmatprep.subr.bf16.mxu0 0
    %310 = vmatpush1.bf16.xpose.msra.mxu0 0
    %311 = vmatprep.subr.bf16.mxu0 0
    %312 = vmatpush1.bf16.xpose.msra.mxu0 0
    %313 = vmatprep.subr.bf16.mxu0 0
    %314 = vmatpush1.bf16.xpose.msra.mxu0 0
    %315 = vmatprep.subr.bf16.mxu0 0
    %316 = vmatpush1.bf16.xpose.msra.mxu0 0
    %317 = vmatprep.subr.bf16.mxu0 0
    %318 = vmatpush1.bf16.xpose.msra.mxu0 0
    %319 = vmatprep.subr.bf16.mxu0 0
    %320 = vmatpush1.bf16.xpose.msra.mxu0 0
    %321 = vmatprep.subr.bf16.mxu0 0
    %322 = vmatpush1.bf16.xpose.msra.mxu0 0
    %323 = vmatprep.subr.bf16.mxu0 0
    %324 = vmatpush1.bf16.xpose.msra.mxu0 0
    %325 = vmatprep.subr.bf16.mxu0 0
    %326 = vmatpush1.bf16.xpose.msra.mxu0 0
    %327 = vmatprep.mubr.bf16.mxu0 0
    %328 = vmatmul.mubr.bf16.gmra.mrb[0].mxu0 %v287
    %v329 = vpop.f32.mrb[0].mxu0
    %v330 = vadd.f32 0.0, %v329
    %v331 = vpop.f32.mrb[0].mxu0
    %v332 = vpop.f32.mrb[0].mxu0
    %v333 = vpop.f32.mrb[0].mxu0
    %334 = vdwg.mxu0
    %v336 = vsel %vm285, %v284, 0
    %v339 = vsel %vm285, %v249, 0
    %v342 = vsel %vm285, %v250, 0
    %344 = vmatprep.subr.bf16.mxu0 0
    %345 = vmatpush1.bf16.xpose.msra.mxu0 %v339
    %346 = vmatprep.subr.bf16.mxu0 0
    %347 = vmatpush1.bf16.xpose.msra.mxu0 %v342
    %348 = vmatprep.subr.bf16.mxu0 0
    %349 = vmatpush1.bf16.xpose.msra.mxu0 0
    %350 = vmatprep.subr.bf16.mxu0 0
    %351 = vmatpush1.bf16.xpose.msra.mxu0 0
    %352 = vmatprep.subr.bf16.mxu0 0
    %353 = vmatpush1.bf16.xpose.msra.mxu0 0
    %354 = vmatprep.subr.bf16.mxu0 0
    %355 = vmatpush1.bf16.xpose.msra.mxu0 0
    %356 = vmatprep.subr.bf16.mxu0 0
    %357 = vmatpush1.bf16.xpose.msra.mxu0 0
    %358 = vmatprep.subr.bf16.mxu0 0
    %359 = vmatpush1.bf16.xpose.msra.mxu0 0
    %360 = vmatprep.subr.bf16.mxu0 0
    %361 = vmatpush1.bf16.xpose.msra.mxu0 0
    %362 = vmatprep.subr.bf16.mxu0 0
    %363 = vmatpush1.bf16.xpose.msra.mxu0 0
    %364 = vmatprep.subr.bf16.mxu0 0
    %365 = vmatpush1.bf16.xpose.msra.mxu0 0
    %366 = vmatprep.subr.bf16.mxu0 0
    %367 = vmatpush1.bf16.xpose.msra.mxu0 0
    %368 = vmatprep.subr.bf16.mxu0 0
    %369 = vmatpush1.bf16.xpose.msra.mxu0 0
    %370 = vmatprep.subr.bf16.mxu0 0
    %371 = vmatpush1.bf16.xpose.msra.mxu0 0
    %372 = vmatprep.subr.bf16.mxu0 0
    %373 = vmatpush1.bf16.xpose.msra.mxu0 0
    %374 = vmatprep.subr.bf16.mxu0 0
    %375 = vmatpush1.bf16.xpose.msra.mxu0 0
    %376 = vmatprep.mubr.bf16.mxu0 0
    %377 = vmatmul.mubr.bf16.gmra.mrb[0].mxu0 %v336
    %v378 = vpop.f32.mrb[0].mxu0
    %v379 = vadd.f32 0.0, %v378
    %v380 = vpop.f32.mrb[0].mxu0
    %v381 = vpop.f32.mrb[0].mxu0
    %v382 = vpop.f32.mrb[0].mxu0
    %383 = vdwg.mxu0
    %v384 = vsel %vm285, %v330, -inf
    %385 = vmax.xlane.f32.xlu0 %v384
    %v386 = vpop.xlane.xlu0 %385
    %v387 = vsel %vm285, %v379, -inf
    %388 = vmax.xlane.f32.xlu0 %v387
    %v389 = vpop.xlane.xlu0 %388
    %v390 = vsub.f32 %v330, %v386
    %v391 = vsub.f32 %v379, %v389
    %v392 = vmul.f32 %v390, 1.442695
    %v393 = vpow.pop %v392
    %v394 = vmul.f32 %v391, 1.442695
    %v395 = vpow.pop %v394
    %v396 = vpack.c.bf16 %v393, %v393
    %v397 = vpack.c.bf16 %v395, %v395
    %400 = vrot.lane.b32.xlu0 %v275, 96
    %v401 = vpop.permute.xlu0 %400
    %402 = vrot.lane.b32.xlu0 %v276, 96
    %v403 = vpop.permute.xlu0 %402
    %v407 = vsel %vm285, %v396, 0
    %409 = vmatprep.subr.bf16.mxu0 0
    %410 = vmatpush1.bf16.msra.mxu0 %v401
    %411 = vmatprep.subr.bf16.mxu0 0
    %412 = vmatpush1.bf16.msra.mxu0 %v403
    %413 = vmatprep.subr.bf16.mxu0 0
    %414 = vmatpush1.bf16.msra.mxu0 0
    %415 = vmatprep.subr.bf16.mxu0 0
    %416 = vmatpush1.bf16.msra.mxu0 0
    %417 = vmatprep.subr.bf16.mxu0 0
    %418 = vmatpush1.bf16.msra.mxu0 0
    %419 = vmatprep.subr.bf16.mxu0 0
    %420 = vmatpush1.bf16.msra.mxu0 0
    %421 = vmatprep.subr.bf16.mxu0 0
    %422 = vmatpush1.bf16.msra.mxu0 0
    %423 = vmatprep.subr.bf16.mxu0 0
    %424 = vmatpush1.bf16.msra.mxu0 0
    %425 = vmatprep.subr.bf16.mxu0 0
    %426 = vmatpush1.bf16.msra.mxu0 0
    %427 = vmatprep.subr.bf16.mxu0 0
    %428 = vmatpush1.bf16.msra.mxu0 0
    %429 = vmatprep.subr.bf16.mxu0 0
    %430 = vmatpush1.bf16.msra.mxu0 0
    %431 = vmatprep.subr.bf16.mxu0 0
    %432 = vmatpush1.bf16.msra.mxu0 0
    %433 = vmatprep.subr.bf16.mxu0 0
    %434 = vmatpush1.bf16.msra.mxu0 0
    %435 = vmatprep.subr.bf16.mxu0 0
    %436 = vmatpush1.bf16.msra.mxu0 0
    %437 = vmatprep.subr.bf16.mxu0 0
    %438 = vmatpush1.bf16.msra.mxu0 0
    %439 = vmatprep.subr.bf16.mxu0 0
    %440 = vmatpush1.bf16.msra.mxu0 0
    %441 = vmatprep.mubr.bf16.mxu0 0
    %442 = vmatmul.mubr.bf16.gmra.mrb[0].mxu0 %v407
    %v443 = vpop.f32.mrb[0].mxu0
    %v444 = vadd.f32 0.0, %v443
    %v445 = vpop.f32.mrb[0].mxu0
    %v446 = vpop.f32.mrb[0].mxu0
    %v447 = vpop.f32.mrb[0].mxu0
    %448 = vdwg.mxu0
    %451 = vrot.lane.b32.xlu0 %v277, 96
    %v452 = vpop.permute.xlu0 %451
    %453 = vrot.lane.b32.xlu0 %v278, 96
    %v454 = vpop.permute.xlu0 %453
    %v458 = vsel %vm285, %v397, 0
    %460 = vmatprep.subr.bf16.mxu0 0
    %461 = vmatpush1.bf16.msra.mxu0 %v452
    %462 = vmatprep.subr.bf16.mxu0 0
    %463 = vmatpush1.bf16.msra.mxu0 %v454
    %464 = vmatprep.subr.bf16.mxu0 0
    %465 = vmatpush1.bf16.msra.mxu0 0
    %466 = vmatprep.subr.bf16.mxu0 0
    %467 = vmatpush1.bf16.msra.mxu0 0
    %468 = vmatprep.subr.bf16.mxu0 0
    %469 = vmatpush1.bf16.msra.mxu0 0
    %470 = vmatprep.subr.bf16.mxu0 0
    %471 = vmatpush1.bf16.msra.mxu0 0
    %472 = vmatprep.subr.bf16.mxu0 0
    %473 = vmatpush1.bf16.msra.mxu0 0
    %474 = vmatprep.subr.bf16.mxu0 0
    %475 = vmatpush1.bf16.msra.mxu0 0
    %476 = vmatprep.subr.bf16.mxu0 0
    %477 = vmatpush1.bf16.msra.mxu0 0
    %478 = vmatprep.subr.bf16.mxu0 0
    %479 = vmatpush1.bf16.msra.mxu0 0
    %480 = vmatprep.subr.bf16.mxu0 0
    %481 = vmatpush1.bf16.msra.mxu0 0
    %482 = vmatprep.subr.bf16.mxu0 0
    %483 = vmatpush1.bf16.msra.mxu0 0
    %484 = vmatprep.subr.bf16.mxu0 0
    %485 = vmatpush1.bf16.msra.mxu0 0
    %486 = vmatprep.subr.bf16.mxu0 0
    %487 = vmatpush1.bf16.msra.mxu0 0
    %488 = vmatprep.subr.bf16.mxu0 0
    %489 = vmatpush1.bf16.msra.mxu0 0
    %490 = vmatprep.subr.bf16.mxu0 0
    %491 = vmatpush1.bf16.msra.mxu0 0
    %492 = vmatprep.mubr.bf16.mxu0 0
    %493 = vmatmul.mubr.bf16.gmra.mrb[0].mxu0 %v458
    %v494 = vpop.f32.mrb[0].mxu0
    %v495 = vadd.f32 0.0, %v494
    %v496 = vpop.f32.mrb[0].mxu0
    %v497 = vpop.f32.mrb[0].mxu0
    %v498 = vpop.f32.mrb[0].mxu0
    %499 = vdwg.mxu0
    %v501 = vsel %vm285, %v393, 0
    %v504 = vsel %vm285, %v395, 0
    %506 = vmatprep.subr.mxu0 0.0
    %507 = vmatpush1.msra.mxu0 %v231
    %508 = vmatprep.subr.mxu0 0.0
    %509 = vmatpush1.msra.mxu0 %v232
    %510 = vmatprep.subr.mxu0 0.0
    %511 = vmatpush1.msra.mxu0 %v233
    %512 = vmatprep.subr.mxu0 0.0
    %513 = vmatpush1.msra.mxu0 %v234
    %514 = vmatprep.subr.mxu0 0.0
    %515 = vmatpush1.msra.mxu0 0.0
    %516 = vmatprep.subr.mxu0 0.0
    %517 = vmatpush1.msra.mxu0 0.0
    %518 = vmatprep.subr.mxu0 0.0
    %519 = vmatpush1.msra.mxu0 0.0
    %520 = vmatprep.subr.mxu0 0.0
    %521 = vmatpush1.msra.mxu0 0.0
    %522 = vmatprep.subr.mxu0 0.0
    %523 = vmatpush1.msra.mxu0 0.0
    %524 = vmatprep.subr.mxu0 0.0
    %525 = vmatpush1.msra.mxu0 0.0
    %526 = vmatprep.subr.mxu0 0.0
    %527 = vmatpush1.msra.mxu0 0.0
    %528 = vmatprep.subr.mxu0 0.0
    %529 = vmatpush1.msra.mxu0 0.0
    %530 = vmatprep.subr.mxu0 0.0
    %531 = vmatpush1.msra.mxu0 0.0
    %532 = vmatprep.subr.mxu0 0.0
    %533 = vmatpush1.msra.mxu0 0.0
    %534 = vmatprep.subr.mxu0 0.0
    %535 = vmatpush1.msra.mxu0 0.0
    %536 = vmatprep.subr.mxu0 0.0
    %537 = vmatpush1.msra.mxu0 0.0
    %538 = vmatprep.subr.mxu0 0.0
    %539 = vmatpush1.msra.mxu0 0.0
    %540 = vmatprep.subr.mxu0 0.0
    %541 = vmatpush1.msra.mxu0 0.0
    %542 = vmatprep.subr.mxu0 0.0
    %543 = vmatpush1.msra.mxu0 0.0
    %544 = vmatprep.subr.mxu0 0.0
    %545 = vmatpush1.msra.mxu0 0.0
    %546 = vmatprep.subr.mxu0 0.0
    %547 = vmatpush1.msra.mxu0 0.0
    %548 = vmatprep.subr.mxu0 0.0
    %549 = vmatpush1.msra.mxu0 0.0
    %550 = vmatprep.subr.mxu0 0.0
    %551 = vmatpush1.msra.mxu0 0.0
    %552 = vmatprep.subr.mxu0 0.0
    %553 = vmatpush1.msra.mxu0 0.0
    %554 = vmatprep.subr.mxu0 0.0
    %555 = vmatpush1.msra.mxu0 0.0
    %556 = vmatprep.subr.mxu0 0.0
    %557 = vmatpush1.msra.mxu0 0.0
    %558 = vmatprep.subr.mxu0 0.0
    %559 = vmatpush1.msra.mxu0 0.0
    %560 = vmatprep.subr.mxu0 0.0
    %561 = vmatpush1.msra.mxu0 0.0
    %562 = vmatprep.subr.mxu0 0.0
    %563 = vmatpush1.msra.mxu0 0.0
    %564 = vmatprep.subr.mxu0 0.0
    %565 = vmatpush1.msra.mxu0 0.0
    %566 = vmatprep.subr.mxu0 0.0
    %567 = vmatpush1.msra.mxu0 0.0
    %568 = vmatprep.subr.mxu0 0.0
    %569 = vmatpush1.msra.mxu0 0.0
    %570 = vmatprep.mubr.f32.mxu0 0.0
    %571 = vmatmul.mubr.f32.gmra.mrb[0].mxu0 %v501
    %v572 = vpop.f32.mrb[0].mxu0
    %v573 = vadd.f32 0.0, %v572
    %v574 = vpop.f32.mrb[0].mxu0
    %575 = vmatprep.mubr.f32.mxu0 0.0
    %576 = vmatmul.mubr.f32.gmra.mrb[0].mxu0 %v504
    %v577 = vpop.f32.mrb[0].mxu0
    %v578 = vadd.f32 0.0, %v577
    %v579 = vpop.f32.mrb[0].mxu0
    %580 = vdwg.mxu0
    %v581 = vrcp.pop %v573
    %v582 = vrcp.pop %v578
    %v583 = vmul.f32 %v444, %v581
    %v584 = vmul.f32 %v495, %v582
    %v585 = vadd.f32 %v152, %v583
    %v586 = vadd.f32 %v155, %v584
    %v587 = vpack.c.bf16 %v586, %v585
    %v588 = vld [vmem:[%s7] sm:$0xf]
    %v589 = vld [vmem:[%s7 + $0x4] sm:$0xf]
    %v590 = vld [vmem:[%s7 + $0x8] sm:$0xf]
    %v591 = vld [vmem:[%s7 + $0xc] sm:$0xf]
    %v592 = vld [vmem:[%s8] sm:$0x1]
    %v594 = vlaneseq
    %v595 = vshrl.u32 %v594, 7
    %v596 = vsub.s32 0, %v595
    %v597 = vrot.slane %v592, %v596
    %v603 = vunpack.c.l.b16 %v588
    %v604 = vunpack.c.l.b16 %v589
    %v605 = vunpack.c.l.b16 %v590
    %v606 = vunpack.c.l.b16 %v591
    %v607 = vpack.c.b16 %v604, %v603
    %v608 = vpack.c.b16 %v606, %v605
    %v612 = vsel %vm285, %v587, 0
    %614 = vmatprep.subr.bf16.mxu0 0
    %615 = vmatpush1.bf16.msra.mxu0 %v607
    %616 = vmatprep.subr.bf16.mxu0 0
    %617 = vmatpush1.bf16.msra.mxu0 %v608
    %618 = vmatprep.subr.bf16.mxu0 0
    %619 = vmatpush1.bf16.msra.mxu0 0
    %620 = vmatprep.subr.bf16.mxu0 0
    %621 = vmatpush1.bf16.msra.mxu0 0
    %622 = vmatprep.subr.bf16.mxu0 0
    %623 = vmatpush1.bf16.msra.mxu0 0
    %624 = vmatprep.subr.bf16.mxu0 0
    %625 = vmatpush1.bf16.msra.mxu0 0
    %626 = vmatprep.subr.bf16.mxu0 0
    %627 = vmatpush1.bf16.msra.mxu0 0
    %628 = vmatprep.subr.bf16.mxu0 0
    %629 = vmatpush1.bf16.msra.mxu0 0
    %630 = vmatprep.subr.bf16.mxu0 0
    %631 = vmatpush1.bf16.msra.mxu0 0
    %632 = vmatprep.subr.bf16.mxu0 0
    %633 = vmatpush1.bf16.msra.mxu0 0
    %634 = vmatprep.subr.bf16.mxu0 0
    %635 = vmatpush1.bf16.msra.mxu0 0
    %636 = vmatprep.subr.bf16.mxu0 0
    %637 = vmatpush1.bf16.msra.mxu0 0
    %638 = vmatprep.subr.bf16.mxu0 0
    %639 = vmatpush1.bf16.msra.mxu0 0
    %640 = vmatprep.subr.bf16.mxu0 0
    %641 = vmatpush1.bf16.msra.mxu0 0
    %642 = vmatprep.subr.bf16.mxu0 0
    %643 = vmatpush1.bf16.msra.mxu0 0
    %644 = vmatprep.subr.bf16.mxu0 0
    %645 = vmatpush1.bf16.msra.mxu0 0
    %646 = vmatprep.mubr.bf16.mxu0 0
    %647 = vmatmul.mubr.bf16.gmra.mrb[0].mxu0 %v612
    %v648 = vpop.f32.mrb[0].mxu0
    %v649 = vadd.f32 %v597, %v648
    %v650 = vpop.f32.mrb[0].mxu0
    %v651 = vpop.f32.mrb[0].mxu0
    %v652 = vadd.f32 %v597, %v651
    %v653 = vpop.f32.mrb[0].mxu0
    %654 = vdwg.mxu0
    %v655 = vmax.f32 %v649, 0.0
    %v656 = vmax.f32 %v652, 0.0
    %v657 = vadd.f32 %v585, %v655
    %v658 = vadd.f32 %v586, %v656
    %659 = vst.msk [vmem:[#allocation10] sm:$0xff] %vm285, %v657
    %660 = vst.msk [vmem:[#allocation10 + $0x8] sm:$0xff] %vm285, %v658
    // Predicated region
    $region54: #{tpu_custom_call.1} parent=1 // pred_check
      _
    $region55: #{tpu_custom_call.1} parent=1 // pred_check_branch
      %662 = sbr.rel (0) target = $region57
    $region56: #{tpu_custom_call.1} parent=1 // pred_region
      %s664 = ssub.s32 256, 256
      %665 = vsyncadd [#allocation4], %s664
      %s666 = sshll.u32 [#allocation10], 4
      %s667 = int_to_ptr.vmem [resolvable:$true] %s666
      %672 = dma.vmem_to_hbm [thread:$0]  %s667, 256, %s9, [#allocation4], 128, 128, 8
    $region57: #{tpu_custom_call.1} parent=1 // pred_fallthru
      _
    // Predicated region
    $region58: #{tpu_custom_call.1} parent=1 // pred_check
      _
    $region59: #{tpu_custom_call.1} parent=1 // pred_check_branch
      %674 = sbr.rel (0) target = $region61
    $region60: #{tpu_custom_call.1} parent=1 // pred_region
      %675 = dma.done [#allocation4], 256
    $region61: #{tpu_custom_call.1} parent=1 // pred_fallthru
      _
    %676 = vsyncpa [#allocation3], 1
    %677 = vsyncpa [#allocation6], 1
    %678 = vsyncpa [#allocation9], 1
    %679 = vsyncpa [#allocation4], 1

</llo_original>
